<compile_context>
chip_gen: v6e
topology: v6e:2x2x1
jax: 0.10.0
libtpu: 0.0.40
codegen_flags: <defaults>
</compile_context>

<pallas_src>
import jax
import jax.numpy as jnp
from jax.experimental import pallas as pl
from jax.experimental.pallas import tpu as pltpu

L = 12  # number of transformer layers whose hidden states are mixed


def weighted_layer_sum_kernel(w_sref, *refs):
    """Weighted sum over L separate layer tiles.

    w_sref:      SMEM f32 [L]       -- softmax-normalized layer weights (prefetched)
    refs[:L]:    VMEM bf16 (tn, D)  -- one tile per layer
    refs[L]:     VMEM bf16 (tn, D)  -- output tile
    """
    x_refs = refs[:L]
    o_ref = refs[L]
    # Unrolled f32 accumulation; scalar (SMEM) * vector is a native VPU
    # broadcast, so each layer is one convert+mul+add pass that hides under DMA.
    acc = x_refs[0][...].astype(jnp.float32) * w_sref[0]
    for l in range(1, L):
        acc = acc + x_refs[l][...].astype(jnp.float32) * w_sref[l]
    o_ref[...] = acc.astype(o_ref.dtype)


def _round_up(a, m):
    return ((a + m - 1) // m) * m


def _chip_profile():
    """(vmem_capacity_bytes, num_tensorcores_per_chip, is_v7x_like)."""
    kind = ""
    try:
        kind = jax.devices()[0].device_kind.lower()
    except Exception:
        pass
    is_v7 = ("v7" in kind) or ("tpu7" in kind)
    vmem = (64 << 20) if is_v7 else (128 << 20)
    try:
        vmem = int(pltpu.get_tpu_info().vmem_capacity_bytes)
    except Exception:
        pass
    # Heuristic: 64 MiB-per-core parts are the 2-TC megacore generation.
    if vmem <= (64 << 20):
        is_v7 = True
    num_tc = 2 if is_v7 else 1
    return vmem, num_tc, is_v7


def _pick_tn(N, D, vmem_bytes, num_tc, target_tn=512):
    """Token-tile size: multiple of 16 (bf16 sublane pack), as large as ~40% of
    physical VMEM allows (double-buffered), balanced across TCs only on v7x."""
    budget = int(vmem_bytes * 0.40)
    # Per-row VMEM bytes: double-buffered bf16 inputs (L layers) + double-
    # buffered bf16 output + f32 accumulator intermediate.
    row_bytes = 2 * L * D * 2 + 2 * D * 2 + D * 4
    tn_cap = max(16, (budget // row_bytes) // 16 * 16)
    tn = max(16, min(target_tn, tn_cap, _round_up(N, 16)))

    if num_tc > 1 and N >= 512:
        # v7x megacore: aim for an even, balanced number of grid steps so both
        # TensorCores stream HBM; only when each core still gets >= 256 rows.
        steps = pl.cdiv(N, tn)
        if steps == 1:
            tn = max(16, _round_up(pl.cdiv(N, 2), 16))
        elif steps % 2 == 1:
            tn = max(16, _round_up(pl.cdiv(N, steps + 1), 16))
    return tn


def feature_extractor_head(hidden_states, weight_hidd, *, tn=None):
    """JAX wrapper: softmax of the 12 layer weights (12-element glue, plain
    JAX) + Pallas kernel for the weighted layer reduction (hot path).

    hidden_states: sequence of L bf16 arrays [B, T, D]
                   (== outputs.hidden_states[1:], NO torch.stack needed)
    weight_hidd:   bf16 [L]
    returns:       bf16 [B, T, D]
    """
    hidden_states = list(hidden_states)
    assert len(hidden_states) == L
    B, T, D = hidden_states[0].shape
    N = B * T
    # Merging leading dims is layout-free (no copy). D should be a multiple of
    # 128 for unmasked lane-dense stores (wav2vec2 D=768 is); other D still
    # works via a full-extent last block dim, just with masked partial stores.
    xs = [h.reshape(N, D) for h in hidden_states]

    # F.softmax(self.weight_hidd, dim=-1): 12 scalars -> negligible glue.
    norm_w = jax.nn.softmax(weight_hidd.astype(jnp.float32), axis=-1)

    vmem_bytes, num_tc, is_v7 = _chip_profile()
    if tn is None:
        tn = _pick_tn(N, D, vmem_bytes, num_tc)
    tn = max(16, _round_up(int(tn), 16))
    tn = min(tn, _round_up(N, 16))

    grid = pl.cdiv(N, tn)  # ragged tail handled by Pallas masked last block

    # Double-buffered per-step VMEM footprint (inputs + output) plus f32 acc;
    # raise the scoped-VMEM limit only when actually needed, and cap it with
    # headroom on 64 MiB-VMEM parts (v7x).
    est_vmem = 2 * L * tn * D * 2 + 2 * tn * D * 2 + tn * D * 4
    cp_kwargs = dict(dimension_semantics=("parallel",))
    if est_vmem > (12 << 20):
        cap = (48 << 20) if is_v7 else (64 << 20)
        cp_kwargs["vmem_limit_bytes"] = int(
            min(max(est_vmem + est_vmem // 2, 32 << 20), cap))

    # Advisory cost: 12 reads + 1 write of bf16 per element, ~2 flops/elem.
    cost = pl.CostEstimate(
        flops=2 * L * N * D,
        transcendentals=0,
        bytes_accessed=(L + 1) * N * D * 2,
    )

    in_specs = [pl.BlockSpec((tn, D), lambda i, w: (i, 0)) for _ in range(L)]

    out = pl.pallas_call(
        weighted_layer_sum_kernel,
        out_shape=jax.ShapeDtypeStruct((N, D), jnp.bfloat16),
        grid_spec=pltpu.PrefetchScalarGridSpec(
            num_scalar_prefetch=1,          # norm_w lands in SMEM
            grid=(grid,),
            in_specs=in_specs,
            out_specs=pl.BlockSpec((tn, D), lambda i, w: (i, 0)),
        ),
        compiler_params=pltpu.CompilerParams(**cp_kwargs),
        cost_estimate=cost,
    )(norm_w, *xs)

    return out.reshape(B, T, D)


if __name__ == "__main__":
    key = jax.random.PRNGKey(0)
    kx, kw, kx2 = jax.random.split(key, 3)

    def ref_mix(hs, w):
        nw = jax.nn.softmax(w.astype(jnp.float32), axis=-1)
        stacked = jnp.stack([h.astype(jnp.float32) for h in hs], axis=0)
        return jnp.sum(nw[:, None, None, None] * stacked, axis=0).astype(jnp.bfloat16)

    # Case 1: small tile-aligned shapes (B*T = 32), D=128 lane-dense.
    B, T, D = 2, 16, 128
    hs = list(jax.random.normal(kx, (L, B, T, D), dtype=jnp.float32).astype(jnp.bfloat16))
    # Module init is zeros(12); use small random logits for a stronger check.
    weight_hidd = (0.1 * jax.random.normal(kw, (L,), dtype=jnp.float32)).astype(jnp.bfloat16)

    out = feature_extractor_head(hs, weight_hidd)
    out = jax.block_until_ready(out)
    ref = ref_mix(hs, weight_hidd)
    assert out.shape == (B, T, D) and out.dtype == jnp.bfloat16
    err = jnp.max(jnp.abs(out.astype(jnp.float32) - ref.astype(jnp.float32)))
    assert float(err) <= 2e-2, f"max abs err {float(err)}"

    # Case 2: ragged token count (B*T = 80, not a multiple of tn=32),
    # exercising the masked last block (no host-side jnp.pad / out slicing).
    B2, T2 = 2, 40
    hs2 = list(jax.random.normal(kx2, (L, B2, T2, D), dtype=jnp.float32).astype(jnp.bfloat16))
    out2 = feature_extractor_head(hs2, weight_hidd, tn=32)
    out2 = jax.block_until_ready(out2)
    ref2 = ref_mix(hs2, weight_hidd)
    assert out2.shape == (B2, T2, D) and out2.dtype == jnp.bfloat16
    err2 = jnp.max(jnp.abs(out2.astype(jnp.float32) - ref2.astype(jnp.float32)))
    assert float(err2) <= 2e-2, f"ragged max abs err {float(err2)}"

    print("KERNEL_OK")
</pallas_src>

<mosaic_0001>
module attributes {stable_mosaic.version = 11 : i64} {
  func.func @weighted_layer_sum_kernel(%arg0: i32, %arg1: memref<12xf32, #tpu.memory_space<smem>>, %arg2: memref<32x128xbf16, #tpu.memory_space<vmem>>, %arg3: memref<32x128xbf16, #tpu.memory_space<vmem>>, %arg4: memref<32x128xbf16, #tpu.memory_space<vmem>>, %arg5: memref<32x128xbf16, #tpu.memory_space<vmem>>, %arg6: memref<32x128xbf16, #tpu.memory_space<vmem>>, %arg7: memref<32x128xbf16, #tpu.memory_space<vmem>>, %arg8: memref<32x128xbf16, #tpu.memory_space<vmem>>, %arg9: memref<32x128xbf16, #tpu.memory_space<vmem>>, %arg10: memref<32x128xbf16, #tpu.memory_space<vmem>>, %arg11: memref<32x128xbf16, #tpu.memory_space<vmem>>, %arg12: memref<32x128xbf16, #tpu.memory_space<vmem>>, %arg13: memref<32x128xbf16, #tpu.memory_space<vmem>>, %arg14: memref<32x128xbf16, #tpu.memory_space<vmem>>) attributes {dimension_semantics = [#tpu.dimension_semantics<parallel>], iteration_bounds = array<i64: 1>, scalar_prefetch = 1 : i64, scratch_operands = 0 : i64, tpu.core_type = #tpu.core_type<tc>, window_params = [{transform_indices = @transform_0, window_bounds = array<i64: 32, 128>}, {transform_indices = @transform_1, window_bounds = array<i64: 32, 128>}, {transform_indices = @transform_2, window_bounds = array<i64: 32, 128>}, {transform_indices = @transform_3, window_bounds = array<i64: 32, 128>}, {transform_indices = @transform_4, window_bounds = array<i64: 32, 128>}, {transform_indices = @transform_5, window_bounds = array<i64: 32, 128>}, {transform_indices = @transform_6, window_bounds = array<i64: 32, 128>}, {transform_indices = @transform_7, window_bounds = array<i64: 32, 128>}, {transform_indices = @transform_8, window_bounds = array<i64: 32, 128>}, {transform_indices = @transform_9, window_bounds = array<i64: 32, 128>}, {transform_indices = @transform_10, window_bounds = array<i64: 32, 128>}, {transform_indices = @transform_11, window_bounds = array<i64: 32, 128>}, {transform_indices = @transform_12, window_bounds = array<i64: 32, 128>}]} {
    %c0 = arith.constant 0 : index
    %c0_0 = arith.constant 0 : index
    %0 = vector.load %arg2[%c0, %c0_0] : memref<32x128xbf16, #tpu.memory_space<vmem>>, vector<32x128xbf16>
    %1 = arith.extf %0 : vector<32x128xbf16> to vector<32x128xf32>
    %c0_1 = arith.constant 0 : index
    %2 = memref.load %arg1[%c0_1] : memref<12xf32, #tpu.memory_space<smem>>
    %3 = vector.broadcast %2 : f32 to vector<32x128xf32>
    %4 = arith.mulf %1, %3 : vector<32x128xf32>
    %c0_2 = arith.constant 0 : index
    %c0_3 = arith.constant 0 : index
    %5 = vector.load %arg3[%c0_2, %c0_3] : memref<32x128xbf16, #tpu.memory_space<vmem>>, vector<32x128xbf16>
    %6 = arith.extf %5 : vector<32x128xbf16> to vector<32x128xf32>
    %c1 = arith.constant 1 : index
    %7 = memref.load %arg1[%c1] : memref<12xf32, #tpu.memory_space<smem>>
    %8 = vector.broadcast %7 : f32 to vector<32x128xf32>
    %9 = arith.mulf %6, %8 : vector<32x128xf32>
    %10 = arith.addf %4, %9 : vector<32x128xf32>
    %c0_4 = arith.constant 0 : index
    %c0_5 = arith.constant 0 : index
    %11 = vector.load %arg4[%c0_4, %c0_5] : memref<32x128xbf16, #tpu.memory_space<vmem>>, vector<32x128xbf16>
    %12 = arith.extf %11 : vector<32x128xbf16> to vector<32x128xf32>
    %c2 = arith.constant 2 : index
    %13 = memref.load %arg1[%c2] : memref<12xf32, #tpu.memory_space<smem>>
    %14 = vector.broadcast %13 : f32 to vector<32x128xf32>
    %15 = arith.mulf %12, %14 : vector<32x128xf32>
    %16 = arith.addf %10, %15 : vector<32x128xf32>
    %c0_6 = arith.constant 0 : index
    %c0_7 = arith.constant 0 : index
    %17 = vector.load %arg5[%c0_6, %c0_7] : memref<32x128xbf16, #tpu.memory_space<vmem>>, vector<32x128xbf16>
    %18 = arith.extf %17 : vector<32x128xbf16> to vector<32x128xf32>
    %c3 = arith.constant 3 : index
    %19 = memref.load %arg1[%c3] : memref<12xf32, #tpu.memory_space<smem>>
    %20 = vector.broadcast %19 : f32 to vector<32x128xf32>
    %21 = arith.mulf %18, %20 : vector<32x128xf32>
    %22 = arith.addf %16, %21 : vector<32x128xf32>
    %c0_8 = arith.constant 0 : index
    %c0_9 = arith.constant 0 : index
    %23 = vector.load %arg6[%c0_8, %c0_9] : memref<32x128xbf16, #tpu.memory_space<vmem>>, vector<32x128xbf16>
    %24 = arith.extf %23 : vector<32x128xbf16> to vector<32x128xf32>
    %c4 = arith.constant 4 : index
    %25 = memref.load %arg1[%c4] : memref<12xf32, #tpu.memory_space<smem>>
    %26 = vector.broadcast %25 : f32 to vector<32x128xf32>
    %27 = arith.mulf %24, %26 : vector<32x128xf32>
    %28 = arith.addf %22, %27 : vector<32x128xf32>
    %c0_10 = arith.constant 0 : index
    %c0_11 = arith.constant 0 : index
    %29 = vector.load %arg7[%c0_10, %c0_11] : memref<32x128xbf16, #tpu.memory_space<vmem>>, vector<32x128xbf16>
    %30 = arith.extf %29 : vector<32x128xbf16> to vector<32x128xf32>
    %c5 = arith.constant 5 : index
    %31 = memref.load %arg1[%c5] : memref<12xf32, #tpu.memory_space<smem>>
    %32 = vector.broadcast %31 : f32 to vector<32x128xf32>
    %33 = arith.mulf %30, %32 : vector<32x128xf32>
    %34 = arith.addf %28, %33 : vector<32x128xf32>
    %c0_12 = arith.constant 0 : index
    %c0_13 = arith.constant 0 : index
    %35 = vector.load %arg8[%c0_12, %c0_13] : memref<32x128xbf16, #tpu.memory_space<vmem>>, vector<32x128xbf16>
    %36 = arith.extf %35 : vector<32x128xbf16> to vector<32x128xf32>
    %c6 = arith.constant 6 : index
    %37 = memref.load %arg1[%c6] : memref<12xf32, #tpu.memory_space<smem>>
    %38 = vector.broadcast %37 : f32 to vector<32x128xf32>
    %39 = arith.mulf %36, %38 : vector<32x128xf32>
    %40 = arith.addf %34, %39 : vector<32x128xf32>
    %c0_14 = arith.constant 0 : index
    %c0_15 = arith.constant 0 : index
    %41 = vector.load %arg9[%c0_14, %c0_15] : memref<32x128xbf16, #tpu.memory_space<vmem>>, vector<32x128xbf16>
    %42 = arith.extf %41 : vector<32x128xbf16> to vector<32x128xf32>
    %c7 = arith.constant 7 : index
    %43 = memref.load %arg1[%c7] : memref<12xf32, #tpu.memory_space<smem>>
    %44 = vector.broadcast %43 : f32 to vector<32x128xf32>
    %45 = arith.mulf %42, %44 : vector<32x128xf32>
    %46 = arith.addf %40, %45 : vector<32x128xf32>
    %c0_16 = arith.constant 0 : index
    %c0_17 = arith.constant 0 : index
    %47 = vector.load %arg10[%c0_16, %c0_17] : memref<32x128xbf16, #tpu.memory_space<vmem>>, vector<32x128xbf16>
    %48 = arith.extf %47 : vector<32x128xbf16> to vector<32x128xf32>
    %c8 = arith.constant 8 : index
    %49 = memref.load %arg1[%c8] : memref<12xf32, #tpu.memory_space<smem>>
    %50 = vector.broadcast %49 : f32 to vector<32x128xf32>
    %51 = arith.mulf %48, %50 : vector<32x128xf32>
    %52 = arith.addf %46, %51 : vector<32x128xf32>
    %c0_18 = arith.constant 0 : index
    %c0_19 = arith.constant 0 : index
    %53 = vector.load %arg11[%c0_18, %c0_19] : memref<32x128xbf16, #tpu.memory_space<vmem>>, vector<32x128xbf16>
    %54 = arith.extf %53 : vector<32x128xbf16> to vector<32x128xf32>
    %c9 = arith.constant 9 : index
    %55 = memref.load %arg1[%c9] : memref<12xf32, #tpu.memory_space<smem>>
    %56 = vector.broadcast %55 : f32 to vector<32x128xf32>
    %57 = arith.mulf %54, %56 : vector<32x128xf32>
    %58 = arith.addf %52, %57 : vector<32x128xf32>
    %c0_20 = arith.constant 0 : index
    %c0_21 = arith.constant 0 : index
    %59 = vector.load %arg12[%c0_20, %c0_21] : memref<32x128xbf16, #tpu.memory_space<vmem>>, vector<32x128xbf16>
    %60 = arith.extf %59 : vector<32x128xbf16> to vector<32x128xf32>
    %c10 = arith.constant 10 : index
    %61 = memref.load %arg1[%c10] : memref<12xf32, #tpu.memory_space<smem>>
    %62 = vector.broadcast %61 : f32 to vector<32x128xf32>
    %63 = arith.mulf %60, %62 : vector<32x128xf32>
    %64 = arith.addf %58, %63 : vector<32x128xf32>
    %c0_22 = arith.constant 0 : index
    %c0_23 = arith.constant 0 : index
    %65 = vector.load %arg13[%c0_22, %c0_23] : memref<32x128xbf16, #tpu.memory_space<vmem>>, vector<32x128xbf16>
    %66 = arith.extf %65 : vector<32x128xbf16> to vector<32x128xf32>
    %c11 = arith.constant 11 : index
    %67 = memref.load %arg1[%c11] : memref<12xf32, #tpu.memory_space<smem>>
    %68 = vector.broadcast %67 : f32 to vector<32x128xf32>
    %69 = arith.mulf %66, %68 : vector<32x128xf32>
    %70 = arith.addf %64, %69 : vector<32x128xf32>
    %71 = arith.truncf %70 : vector<32x128xf32> to vector<32x128xbf16>
    %c0_24 = arith.constant 0 : index
    %c0_25 = arith.constant 0 : index
    %72 = vector.load %arg14[%c0_24, %c0_25] : memref<32x128xbf16, #tpu.memory_space<vmem>>, vector<32x128xbf16>
    tpu.vector_store %arg14[%c0_24, %c0_25], %71 {strides = array<i32>} : memref<32x128xbf16, #tpu.memory_space<vmem>>, vector<32x128xbf16>,
    return
  }
  func.func @transform_0(%arg0: i32, %arg1: memref<12xf32, #tpu.memory_space<smem>>) -> (i32, i32) {
    %c0_i32 = arith.constant 0 : i32
    %c0_i32_0 = arith.constant 0 : i32
    return %arg0, %c0_i32 : i32, i32
  }
  func.func @transform_1(%arg0: i32, %arg1: memref<12xf32, #tpu.memory_space<smem>>) -> (i32, i32) {
    %c0_i32 = arith.constant 0 : i32
    %c0_i32_0 = arith.constant 0 : i32
    return %arg0, %c0_i32 : i32, i32
  }
  func.func @transform_2(%arg0: i32, %arg1: memref<12xf32, #tpu.memory_space<smem>>) -> (i32, i32) {
    %c0_i32 = arith.constant 0 : i32
    %c0_i32_0 = arith.constant 0 : i32
    return %arg0, %c0_i32 : i32, i32
  }
  func.func @transform_3(%arg0: i32, %arg1: memref<12xf32, #tpu.memory_space<smem>>) -> (i32, i32) {
    %c0_i32 = arith.constant 0 : i32
    %c0_i32_0 = arith.constant 0 : i32
    return %arg0, %c0_i32 : i32, i32
  }
  func.func @transform_4(%arg0: i32, %arg1: memref<12xf32, #tpu.memory_space<smem>>) -> (i32, i32) {
    %c0_i32 = arith.constant 0 : i32
    %c0_i32_0 = arith.constant 0 : i32
    return %arg0, %c0_i32 : i32, i32
  }
  func.func @transform_5(%arg0: i32, %arg1: memref<12xf32, #tpu.memory_space<smem>>) -> (i32, i32) {
    %c0_i32 = arith.constant 0 : i32
    %c0_i32_0 = arith.constant 0 : i32
    return %arg0, %c0_i32 : i32, i32
  }
  func.func @transform_6(%arg0: i32, %arg1: memref<12xf32, #tpu.memory_space<smem>>) -> (i32, i32) {
    %c0_i32 = arith.constant 0 : i32
    %c0_i32_0 = arith.constant 0 : i32
    return %arg0, %c0_i32 : i32, i32
  }
  func.func @transform_7(%arg0: i32, %arg1: memref<12xf32, #tpu.memory_space<smem>>) -> (i32, i32) {
    %c0_i32 = arith.constant 0 : i32
    %c0_i32_0 = arith.constant 0 : i32
    return %arg0, %c0_i32 : i32, i32
  }
  func.func @transform_8(%arg0: i32, %arg1: memref<12xf32, #tpu.memory_space<smem>>) -> (i32, i32) {
    %c0_i32 = arith.constant 0 : i32
    %c0_i32_0 = arith.constant 0 : i32
    return %arg0, %c0_i32 : i32, i32
  }
  func.func @transform_9(%arg0: i32, %arg1: memref<12xf32, #tpu.memory_space<smem>>) -> (i32, i32) {
    %c0_i32 = arith.constant 0 : i32
    %c0_i32_0 = arith.constant 0 : i32
    return %arg0, %c0_i32 : i32, i32
  }
  func.func @transform_10(%arg0: i32, %arg1: memref<12xf32, #tpu.memory_space<smem>>) -> (i32, i32) {
    %c0_i32 = arith.constant 0 : i32
    %c0_i32_0 = arith.constant 0 : i32
    return %arg0, %c0_i32 : i32, i32
  }
  func.func @transform_11(%arg0: i32, %arg1: memref<12xf32, #tpu.memory_space<smem>>) -> (i32, i32) {
    %c0_i32 = arith.constant 0 : i32
    %c0_i32_0 = arith.constant 0 : i32
    return %arg0, %c0_i32 : i32, i32
  }
  func.func @transform_12(%arg0: i32, %arg1: memref<12xf32, #tpu.memory_space<smem>>) -> (i32, i32) {
    %c0_i32 = arith.constant 0 : i32
    %c0_i32_0 = arith.constant 0 : i32
    return %arg0, %c0_i32 : i32, i32
  }
}

</mosaic_0001>

<llo_original>
// kernel: tpu_custom_call.1
$region0: #{tpu_custom_call.1}
  #allocation0 [shape = 'u32[]', space=smem, size = 0x4, offset = 0x4, fixed_abs, tag = 'smem constant byte address 0x4 - core index']
  #allocation1 [shape = 'u32[144,128]{1,0:T(1,128)}', space=vmem, size = 0x12000, scoped, tag = 'internal scratch']
  #allocation2 [shape = 's32[1]{0}', space=sflag, size = 0x4, scoped, tag = 'scoped memory for tpu_custom_call.1']
  #allocation3 [shape = 'u8[512]{0}', space=smem, size = 0x200, scoped, tag = 'prefetched SMEM operand 0']
  %s0 = inlined_call_operand.hbm [shape: f32[12], index: 0, kind: input, shape index: {}]
  %s1 = inlined_call_operand.hbm [shape: bf16[32,128], index: 1, kind: input, shape index: {}]
  %s2 = inlined_call_operand.hbm [shape: bf16[32,128], index: 2, kind: input, shape index: {}]
  %s3 = inlined_call_operand.hbm [shape: bf16[32,128], index: 3, kind: input, shape index: {}]
  %s4 = inlined_call_operand.hbm [shape: bf16[32,128], index: 4, kind: input, shape index: {}]
  %s5 = inlined_call_operand.hbm [shape: bf16[32,128], index: 5, kind: input, shape index: {}]
  %s6 = inlined_call_operand.hbm [shape: bf16[32,128], index: 6, kind: input, shape index: {}]
  %s7 = inlined_call_operand.hbm [shape: bf16[32,128], index: 7, kind: input, shape index: {}]
  %s8 = inlined_call_operand.hbm [shape: bf16[32,128], index: 8, kind: input, shape index: {}]
  %s9 = inlined_call_operand.vmem [shape: bf16[32,128], index: 9, kind: input, shape index: {}]
  %s10 = inlined_call_operand.hbm [shape: bf16[32,128], index: 10, kind: input, shape index: {}]
  %s11 = inlined_call_operand.hbm [shape: bf16[32,128], index: 11, kind: input, shape index: {}]
  %s12 = inlined_call_operand.hbm [shape: bf16[32,128], index: 12, kind: input, shape index: {}]
  %s13 = inlined_call_operand.hbm [shape: bf16[32,128], index: 13, kind: output, shape index: {}]
  %s14 = sld [smem:[#allocation0]]
  $region102: #{tpu_custom_call.1} parent=0
    _
  %s16 = ssub.s32 1, %s14
  %s17 = scalar_select 0, %s16, %s14
  %19 = dma.hbm_to_smem %s0, 16, [#allocation3], [#allocation2]
  %20 = dma.done [#allocation2], 16
  %21 = sfence
  $region1: #{tpu_custom_call.1} parent=0
    #allocation4 [shape = 'u8[8192]{0}', space=vmem, size = 0x2000, scoped, tag = 'input window, operand 1, single buffered']
    #allocation5 [shape = 's32[1]{0}', space=sflag, size = 0x4, scoped, tag = 'scoped memory for tpu_custom_call.1']
    #allocation6 [shape = 's32[1]{0}', space=sflag, size = 0x4, scoped, tag = 'scoped memory for tpu_custom_call.1']
    #allocation7 [shape = 'u8[8192]{0}', space=vmem, size = 0x2000, scoped, tag = 'input window, operand 2, single buffered']
    #allocation8 [shape = 's32[1]{0}', space=sflag, size = 0x4, scoped, tag = 'scoped memory for tpu_custom_call.1']
    #allocation9 [shape = 'u8[8192]{0}', space=vmem, size = 0x2000, scoped, tag = 'input window, operand 3, single buffered']
    #allocation10 [shape = 'u8[8192]{0}', space=vmem, size = 0x2000, scoped, tag = 'input window, operand 4, single buffered']
    #allocation11 [shape = 's32[1]{0}', space=sflag, size = 0x4, scoped, tag = 'scoped memory for tpu_custom_call.1']
    #allocation12 [shape = 'u8[8192]{0}', space=vmem, size = 0x2000, scoped, tag = 'input window, operand 5, single buffered']
    #allocation13 [shape = 'u8[8192]{0}', space=vmem, size = 0x2000, scoped, tag = 'input window, operand 6, single buffered']
    #allocation14 [shape = 's32[1]{0}', space=sflag, size = 0x4, scoped, tag = 'scoped memory for tpu_custom_call.1']
    #allocation15 [shape = 'u8[8192]{0}', space=vmem, size = 0x2000, scoped, tag = 'input window, operand 7, single buffered']
    #allocation16 [shape = 'u8[8192]{0}', space=vmem, size = 0x2000, scoped, tag = 'input window, operand 8, single buffered']
    #allocation17 [shape = 's32[1]{0}', space=sflag, size = 0x4, scoped, tag = 'scoped memory for tpu_custom_call.1']
    #allocation18 [shape = 'u8[8192]{0}', space=vmem, size = 0x2000, scoped, tag = 'input window, operand 10, single buffered']
    #allocation19 [shape = 'u8[8192]{0}', space=vmem, size = 0x2000, scoped, tag = 'input window, operand 11, single buffered']
    #allocation20 [shape = 's32[1]{0}', space=sflag, size = 0x4, scoped, tag = 'scoped memory for tpu_custom_call.1']
    #allocation21 [shape = 'u8[8192]{0}', space=vmem, size = 0x2000, scoped, tag = 'input window, operand 12, single buffered']
    #allocation22 [shape = 'u8[8192]{0}', space=vmem, size = 0x2000, scoped, tag = 'output window, operand 0, single buffered']
    %22 = vsyncpa [#allocation5], 0
    %23 = vsyncpa [#allocation8], 0
    %24 = vsyncpa [#allocation11], 0
    %25 = vsyncpa [#allocation14], 0
    %26 = vsyncpa [#allocation17], 0
    %27 = vsyncpa [#allocation20], 0
    %28 = vsyncpa [#allocation6], 0
    // Predicated region
    $region2: #{tpu_custom_call.1} parent=1 // pred_check
      _
    $region3: #{tpu_custom_call.1} parent=1 // pred_check_branch
      %30 = sbr.rel (0) target = $region5
    $region4: #{tpu_custom_call.1} parent=1 // pred_region
      %s32 = ssub.s32 256, 256
      %33 = vsyncadd [#allocation5], %s32
      %s34 = sshll.u32 [#allocation4], 4
      %s35 = int_to_ptr.vmem [resolvable:$true] %s34
      %40 = dma.hbm_to_vmem [thread:$0]  %s1, 256, %s35, [#allocation5], 64, 64, 4
    $region5: #{tpu_custom_call.1} parent=1 // pred_fallthru
      _
    // Predicated region
    $region6: #{tpu_custom_call.1} parent=1 // pred_check
      _
    $region7: #{tpu_custom_call.1} parent=1 // pred_check_branch
      %42 = sbr.rel (0) target = $region9
    $region8: #{tpu_custom_call.1} parent=1 // pred_region
      %s44 = ssub.s32 256, 256
      %45 = vsyncadd [#allocation8], %s44
      %s46 = sshll.u32 [#allocation7], 4
      %s47 = int_to_ptr.vmem [resolvable:$true] %s46
      %52 = dma.hbm_to_vmem [thread:$0]  %s2, 256, %s47, [#allocation8], 64, 64, 4
    $region9: #{tpu_custom_call.1} parent=1 // pred_fallthru
      _
    // Predicated region
    $region10: #{tpu_custom_call.1} parent=1 // pred_check
      _
    $region11: #{tpu_custom_call.1} parent=1 // pred_check_branch
      %54 = sbr.rel (0) target = $region13
    $region12: #{tpu_custom_call.1} parent=1 // pred_region
      %s56 = ssub.s32 256, 256
      %57 = vsyncadd [#allocation8], %s56
      %s58 = sshll.u32 [#allocation9], 4
      %s59 = int_to_ptr.vmem [resolvable:$true] %s58
      %64 = dma.hbm_to_vmem [thread:$0]  %s3, 256, %s59, [#allocation8], 64, 64, 4
    $region13: #{tpu_custom_call.1} parent=1 // pred_fallthru
      _
    // Predicated region
    $region14: #{tpu_custom_call.1} parent=1 // pred_check
      _
    $region15: #{tpu_custom_call.1} parent=1 // pred_check_branch
      %66 = sbr.rel (0) target = $region17
    $region16: #{tpu_custom_call.1} parent=1 // pred_region
      %s68 = ssub.s32 256, 256
      %69 = vsyncadd [#allocation11], %s68
      %s70 = sshll.u32 [#allocation10], 4
      %s71 = int_to_ptr.vmem [resolvable:$true] %s70
      %76 = dma.hbm_to_vmem [thread:$0]  %s4, 256, %s71, [#allocation11], 64, 64, 4
    $region17: #{tpu_custom_call.1} parent=1 // pred_fallthru
      _
    // Predicated region
    $region18: #{tpu_custom_call.1} parent=1 // pred_check
      _
    $region19: #{tpu_custom_call.1} parent=1 // pred_check_branch
      %78 = sbr.rel (0) target = $region21
    $region20: #{tpu_custom_call.1} parent=1 // pred_region
      %s80 = ssub.s32 256, 256
      %81 = vsyncadd [#allocation11], %s80
      %s82 = sshll.u32 [#allocation12], 4
      %s83 = int_to_ptr.vmem [resolvable:$true] %s82
      %88 = dma.hbm_to_vmem [thread:$0]  %s5, 256, %s83, [#allocation11], 64, 64, 4
    $region21: #{tpu_custom_call.1} parent=1 // pred_fallthru
      _
    // Predicated region
    $region22: #{tpu_custom_call.1} parent=1 // pred_check
      _
    $region23: #{tpu_custom_call.1} parent=1 // pred_check_branch
      %90 = sbr.rel (0) target = $region25
    $region24: #{tpu_custom_call.1} parent=1 // pred_region
      %s92 = ssub.s32 256, 256
      %93 = vsyncadd [#allocation14], %s92
      %s94 = sshll.u32 [#allocation13], 4
      %s95 = int_to_ptr.vmem [resolvable:$true] %s94
      %100 = dma.hbm_to_vmem [thread:$0]  %s6, 256, %s95, [#allocation14], 64, 64, 4
    $region25: #{tpu_custom_call.1} parent=1 // pred_fallthru
      _
    // Predicated region
    $region26: #{tpu_custom_call.1} parent=1 // pred_check
      _
    $region27: #{tpu_custom_call.1} parent=1 // pred_check_branch
      %102 = sbr.rel (0) target = $region29
    $region28: #{tpu_custom_call.1} parent=1 // pred_region
      %s104 = ssub.s32 256, 256
      %105 = vsyncadd [#allocation14], %s104
      %s106 = sshll.u32 [#allocation15], 4
      %s107 = int_to_ptr.vmem [resolvable:$true] %s106
      %112 = dma.hbm_to_vmem [thread:$0]  %s7, 256, %s107, [#allocation14], 64, 64, 4
    $region29: #{tpu_custom_call.1} parent=1 // pred_fallthru
      _
    // Predicated region
    $region30: #{tpu_custom_call.1} parent=1 // pred_check
      _
    $region31: #{tpu_custom_call.1} parent=1 // pred_check_branch
      %114 = sbr.rel (0) target = $region33
    $region32: #{tpu_custom_call.1} parent=1 // pred_region
      %s116 = ssub.s32 256, 256
      %117 = vsyncadd [#allocation17], %s116
      %s118 = sshll.u32 [#allocation16], 4
      %s119 = int_to_ptr.vmem [resolvable:$true] %s118
      %124 = dma.hbm_to_vmem [thread:$0]  %s8, 256, %s119, [#allocation17], 64, 64, 4
    $region33: #{tpu_custom_call.1} parent=1 // pred_fallthru
      _
    // Predicated region
    $region34: #{tpu_custom_call.1} parent=1 // pred_check
      _
    $region35: #{tpu_custom_call.1} parent=1 // pred_check_branch
      %126 = sbr.rel (0) target = $region37
    $region36: #{tpu_custom_call.1} parent=1 // pred_region
      _
    $region37: #{tpu_custom_call.1} parent=1 // pred_fallthru
      _
    // Predicated region
    $region38: #{tpu_custom_call.1} parent=1 // pred_check
      _
    $region39: #{tpu_custom_call.1} parent=1 // pred_check_branch
      %128 = sbr.rel (0) target = $region41
    $region40: #{tpu_custom_call.1} parent=1 // pred_region
      %s130 = ssub.s32 256, 256
      %131 = vsyncadd [#allocation17], %s130
      %s132 = sshll.u32 [#allocation18], 4
      %s133 = int_to_ptr.vmem [resolvable:$true] %s132
      %138 = dma.hbm_to_vmem [thread:$0]  %s10, 256, %s133, [#allocation17], 64, 64, 4
    $region41: #{tpu_custom_call.1} parent=1 // pred_fallthru
      _
    // Predicated region
    $region42: #{tpu_custom_call.1} parent=1 // pred_check
      _
    $region43: #{tpu_custom_call.1} parent=1 // pred_check_branch
      %140 = sbr.rel (0) target = $region45
    $region44: #{tpu_custom_call.1} parent=1 // pred_region
      %s142 = ssub.s32 256, 256
      %143 = vsyncadd [#allocation20], %s142
      %s144 = sshll.u32 [#allocation19], 4
      %s145 = int_to_ptr.vmem [resolvable:$true] %s144
      %150 = dma.hbm_to_vmem [thread:$0]  %s11, 256, %s145, [#allocation20], 64, 64, 4
    $region45: #{tpu_custom_call.1} parent=1 // pred_fallthru
      _
    // Predicated region
    $region46: #{tpu_custom_call.1} parent=1 // pred_check
      _
    $region47: #{tpu_custom_call.1} parent=1 // pred_check_branch
      %152 = sbr.rel (0) target = $region49
    $region48: #{tpu_custom_call.1} parent=1 // pred_region
      %s154 = ssub.s32 256, 256
      %155 = vsyncadd [#allocation20], %s154
      %s156 = sshll.u32 [#allocation21], 4
      %s157 = int_to_ptr.vmem [resolvable:$true] %s156
      %162 = dma.hbm_to_vmem [thread:$0]  %s12, 256, %s157, [#allocation20], 64, 64, 4
    $region49: #{tpu_custom_call.1} parent=1 // pred_fallthru
      _
    // Predicated region
    $region50: #{tpu_custom_call.1} parent=1 // pred_check
      _
    $region51: #{tpu_custom_call.1} parent=1 // pred_check_branch
      %164 = sbr.rel (0) target = $region53
    $region52: #{tpu_custom_call.1} parent=1 // pred_region
      %165 = dma.done [#allocation5], 256
    $region53: #{tpu_custom_call.1} parent=1 // pred_fallthru
      _
    // Predicated region
    $region54: #{tpu_custom_call.1} parent=1 // pred_check
      _
    $region55: #{tpu_custom_call.1} parent=1 // pred_check_branch
      %167 = sbr.rel (0) target = $region57
    $region56: #{tpu_custom_call.1} parent=1 // pred_region
      %168 = dma.done [#allocation8], 256
    $region57: #{tpu_custom_call.1} parent=1 // pred_fallthru
      _
    // Predicated region
    $region58: #{tpu_custom_call.1} parent=1 // pred_check
      _
    $region59: #{tpu_custom_call.1} parent=1 // pred_check_branch
      %170 = sbr.rel (0) target = $region61
    $region60: #{tpu_custom_call.1} parent=1 // pred_region
      %171 = dma.done [#allocation8], 256
    $region61: #{tpu_custom_call.1} parent=1 // pred_fallthru
      _
    // Predicated region
    $region62: #{tpu_custom_call.1} parent=1 // pred_check
      _
    $region63: #{tpu_custom_call.1} parent=1 // pred_check_branch
      %173 = sbr.rel (0) target = $region65
    $region64: #{tpu_custom_call.1} parent=1 // pred_region
      %174 = dma.done [#allocation11], 256
    $region65: #{tpu_custom_call.1} parent=1 // pred_fallthru
      _
    // Predicated region
    $region66: #{tpu_custom_call.1} parent=1 // pred_check
      _
    $region67: #{tpu_custom_call.1} parent=1 // pred_check_branch
      %176 = sbr.rel (0) target = $region69
    $region68: #{tpu_custom_call.1} parent=1 // pred_region
      %177 = dma.done [#allocation11], 256
    $region69: #{tpu_custom_call.1} parent=1 // pred_fallthru
      _
    // Predicated region
    $region70: #{tpu_custom_call.1} parent=1 // pred_check
      _
    $region71: #{tpu_custom_call.1} parent=1 // pred_check_branch
      %179 = sbr.rel (0) target = $region73
    $region72: #{tpu_custom_call.1} parent=1 // pred_region
      %180 = dma.done [#allocation14], 256
    $region73: #{tpu_custom_call.1} parent=1 // pred_fallthru
      _
    // Predicated region
    $region74: #{tpu_custom_call.1} parent=1 // pred_check
      _
    $region75: #{tpu_custom_call.1} parent=1 // pred_check_branch
      %182 = sbr.rel (0) target = $region77
    $region76: #{tpu_custom_call.1} parent=1 // pred_region
      %183 = dma.done [#allocation14], 256
    $region77: #{tpu_custom_call.1} parent=1 // pred_fallthru
      _
    // Predicated region
    $region78: #{tpu_custom_call.1} parent=1 // pred_check
      _
    $region79: #{tpu_custom_call.1} parent=1 // pred_check_branch
      %185 = sbr.rel (0) target = $region81
    $region80: #{tpu_custom_call.1} parent=1 // pred_region
      %186 = dma.done [#allocation17], 256
    $region81: #{tpu_custom_call.1} parent=1 // pred_fallthru
      _
    // Predicated region
    $region82: #{tpu_custom_call.1} parent=1 // pred_check
      _
    $region83: #{tpu_custom_call.1} parent=1 // pred_check_branch
      %188 = sbr.rel (0) target = $region85
    $region84: #{tpu_custom_call.1} parent=1 // pred_region
      %189 = dma.done [#allocation17], 256
    $region85: #{tpu_custom_call.1} parent=1 // pred_fallthru
      _
    // Predicated region
    $region86: #{tpu_custom_call.1} parent=1 // pred_check
      _
    $region87: #{tpu_custom_call.1} parent=1 // pred_check_branch
      %191 = sbr.rel (0) target = $region89
    $region88: #{tpu_custom_call.1} parent=1 // pred_region
      %192 = dma.done [#allocation20], 256
    $region89: #{tpu_custom_call.1} parent=1 // pred_fallthru
      _
    // Predicated region
    $region90: #{tpu_custom_call.1} parent=1 // pred_check
      _
    $region91: #{tpu_custom_call.1} parent=1 // pred_check_branch
      %194 = sbr.rel (0) target = $region93
    $region92: #{tpu_custom_call.1} parent=1 // pred_region
      %195 = dma.done [#allocation20], 256
    $region93: #{tpu_custom_call.1} parent=1 // pred_fallthru
      _
    %v196 = vld [vmem:[#allocation4] sm:$0xf]
    %v197 = vld [vmem:[#allocation4 + $0x4] sm:$0xf]
    %v198 = vld [vmem:[#allocation4 + $0x8] sm:$0xf]
    %v199 = vld [vmem:[#allocation4 + $0xc] sm:$0xf]
    %v200 = vunpack.c.l.bf16 %v196
    %v201 = vunpack.c.l.bf16 %v197
    %v202 = vunpack.c.l.bf16 %v198
    %v203 = vunpack.c.l.bf16 %v199
    %s204 = sld [smem:[#allocation3]]
    %v205 = vstv %s204
    %v206 = vmul.f32 %v200, %v205
    %v207 = vmul.f32 %v201, %v205
    %v208 = vmul.f32 %v202, %v205
    %v209 = vmul.f32 %v203, %v205
    %v210 = vld [vmem:[#allocation7] sm:$0xf]
    %v211 = vld [vmem:[#allocation7 + $0x4] sm:$0xf]
    %v212 = vld [vmem:[#allocation7 + $0x8] sm:$0xf]
    %v213 = vld [vmem:[#allocation7 + $0xc] sm:$0xf]
    %v214 = vunpack.c.l.bf16 %v210
    %v215 = vunpack.c.l.bf16 %v211
    %v216 = vunpack.c.l.bf16 %v212
    %v217 = vunpack.c.l.bf16 %v213
    %s218 = sld [smem:[#allocation3 + $0x1]]
    %v219 = vstv %s218
    %v220 = vmul.f32 %v214, %v219
    %v221 = vmul.f32 %v215, %v219
    %v222 = vmul.f32 %v216, %v219
    %v223 = vmul.f32 %v217, %v219
    %v224 = vadd.f32 %v206, %v220
    %v225 = vadd.f32 %v207, %v221
    %v226 = vadd.f32 %v208, %v222
    %v227 = vadd.f32 %v209, %v223
    %v228 = vld [vmem:[#allocation9] sm:$0xf]
    %v229 = vld [vmem:[#allocation9 + $0x4] sm:$0xf]
    %v230 = vld [vmem:[#allocation9 + $0x8] sm:$0xf]
    %v231 = vld [vmem:[#allocation9 + $0xc] sm:$0xf]
    %v232 = vunpack.c.l.bf16 %v228
    %v233 = vunpack.c.l.bf16 %v229
    %v234 = vunpack.c.l.bf16 %v230
    %v235 = vunpack.c.l.bf16 %v231
    %s236 = sld [smem:[#allocation3 + $0x2]]
    %v237 = vstv %s236
    %v238 = vmul.f32 %v232, %v237
    %v239 = vmul.f32 %v233, %v237
    %v240 = vmul.f32 %v234, %v237
    %v241 = vmul.f32 %v235, %v237
    %v242 = vadd.f32 %v224, %v238
    %v243 = vadd.f32 %v225, %v239
    %v244 = vadd.f32 %v226, %v240
    %v245 = vadd.f32 %v227, %v241
    %v246 = vld [vmem:[#allocation10] sm:$0xf]
    %v247 = vld [vmem:[#allocation10 + $0x4] sm:$0xf]
    %v248 = vld [vmem:[#allocation10 + $0x8] sm:$0xf]
    %v249 = vld [vmem:[#allocation10 + $0xc] sm:$0xf]
    %v250 = vunpack.c.l.bf16 %v246
    %v251 = vunpack.c.l.bf16 %v247
    %v252 = vunpack.c.l.bf16 %v248
    %v253 = vunpack.c.l.bf16 %v249
    %s254 = sld [smem:[#allocation3 + $0x3]]
    %v255 = vstv %s254
    %v256 = vmul.f32 %v250, %v255
    %v257 = vmul.f32 %v251, %v255
    %v258 = vmul.f32 %v252, %v255
    %v259 = vmul.f32 %v253, %v255
    %v260 = vadd.f32 %v242, %v256
    %v261 = vadd.f32 %v243, %v257
    %v262 = vadd.f32 %v244, %v258
    %v263 = vadd.f32 %v245, %v259
    %v264 = vld [vmem:[#allocation12] sm:$0xf]
    %v265 = vld [vmem:[#allocation12 + $0x4] sm:$0xf]
    %v266 = vld [vmem:[#allocation12 + $0x8] sm:$0xf]
    %v267 = vld [vmem:[#allocation12 + $0xc] sm:$0xf]
    %v268 = vunpack.c.l.bf16 %v264
    %v269 = vunpack.c.l.bf16 %v265
    %v270 = vunpack.c.l.bf16 %v266
    %v271 = vunpack.c.l.bf16 %v267
    %s272 = sld [smem:[#allocation3 + $0x4]]
    %v273 = vstv %s272
    %v274 = vmul.f32 %v268, %v273
    %v275 = vmul.f32 %v269, %v273
    %v276 = vmul.f32 %v270, %v273
    %v277 = vmul.f32 %v271, %v273
    %v278 = vadd.f32 %v260, %v274
    %v279 = vadd.f32 %v261, %v275
    %v280 = vadd.f32 %v262, %v276
    %v281 = vadd.f32 %v263, %v277
    %v282 = vld [vmem:[#allocation13] sm:$0xf]
    %v283 = vld [vmem:[#allocation13 + $0x4] sm:$0xf]
    %v284 = vld [vmem:[#allocation13 + $0x8] sm:$0xf]
    %v285 = vld [vmem:[#allocation13 + $0xc] sm:$0xf]
    %v286 = vunpack.c.l.bf16 %v282
    %v287 = vunpack.c.l.bf16 %v283
    %v288 = vunpack.c.l.bf16 %v284
    %v289 = vunpack.c.l.bf16 %v285
    %s290 = sld [smem:[#allocation3 + $0x5]]
    %v291 = vstv %s290
    %v292 = vmul.f32 %v286, %v291
    %v293 = vmul.f32 %v287, %v291
    %v294 = vmul.f32 %v288, %v291
    %v295 = vmul.f32 %v289, %v291
    %v296 = vadd.f32 %v278, %v292
    %v297 = vadd.f32 %v279, %v293
    %v298 = vadd.f32 %v280, %v294
    %v299 = vadd.f32 %v281, %v295
    %v300 = vld [vmem:[#allocation15] sm:$0xf]
    %v301 = vld [vmem:[#allocation15 + $0x4] sm:$0xf]
    %v302 = vld [vmem:[#allocation15 + $0x8] sm:$0xf]
    %v303 = vld [vmem:[#allocation15 + $0xc] sm:$0xf]
    %v304 = vunpack.c.l.bf16 %v300
    %v305 = vunpack.c.l.bf16 %v301
    %v306 = vunpack.c.l.bf16 %v302
    %v307 = vunpack.c.l.bf16 %v303
    %s308 = sld [smem:[#allocation3 + $0x6]]
    %v309 = vstv %s308
    %v310 = vmul.f32 %v304, %v309
    %v311 = vmul.f32 %v305, %v309
    %v312 = vmul.f32 %v306, %v309
    %v313 = vmul.f32 %v307, %v309
    %v314 = vadd.f32 %v296, %v310
    %v315 = vadd.f32 %v297, %v311
    %v316 = vadd.f32 %v298, %v312
    %v317 = vadd.f32 %v299, %v313
    %v318 = vld [vmem:[#allocation16] sm:$0xf]
    %v319 = vld [vmem:[#allocation16 + $0x4] sm:$0xf]
    %v320 = vld [vmem:[#allocation16 + $0x8] sm:$0xf]
    %v321 = vld [vmem:[#allocation16 + $0xc] sm:$0xf]
    %v322 = vunpack.c.l.bf16 %v318
    %v323 = vunpack.c.l.bf16 %v319
    %v324 = vunpack.c.l.bf16 %v320
    %v325 = vunpack.c.l.bf16 %v321
    %s326 = sld [smem:[#allocation3 + $0x7]]
    %v327 = vstv %s326
    %v328 = vmul.f32 %v322, %v327
    %v329 = vmul.f32 %v323, %v327
    %v330 = vmul.f32 %v324, %v327
    %v331 = vmul.f32 %v325, %v327
    %v332 = vadd.f32 %v314, %v328
    %v333 = vadd.f32 %v315, %v329
    %v334 = vadd.f32 %v316, %v330
    %v335 = vadd.f32 %v317, %v331
    %v336 = vld [vmem:[%s9] sm:$0xf]
    %v337 = vld [vmem:[%s9 + $0x4] sm:$0xf]
    %v338 = vld [vmem:[%s9 + $0x8] sm:$0xf]
    %v339 = vld [vmem:[%s9 + $0xc] sm:$0xf]
    %v340 = vunpack.c.l.bf16 %v336
    %v341 = vunpack.c.l.bf16 %v337
    %v342 = vunpack.c.l.bf16 %v338
    %v343 = vunpack.c.l.bf16 %v339
    %s344 = sld [smem:[#allocation3 + $0x8]]
    %v345 = vstv %s344
    %v346 = vmul.f32 %v340, %v345
    %v347 = vmul.f32 %v341, %v345
    %v348 = vmul.f32 %v342, %v345
    %v349 = vmul.f32 %v343, %v345
    %v350 = vadd.f32 %v332, %v346
    %v351 = vadd.f32 %v333, %v347
    %v352 = vadd.f32 %v334, %v348
    %v353 = vadd.f32 %v335, %v349
    %v354 = vld [vmem:[#allocation18] sm:$0xf]
    %v355 = vld [vmem:[#allocation18 + $0x4] sm:$0xf]
    %v356 = vld [vmem:[#allocation18 + $0x8] sm:$0xf]
    %v357 = vld [vmem:[#allocation18 + $0xc] sm:$0xf]
    %v358 = vunpack.c.l.bf16 %v354
    %v359 = vunpack.c.l.bf16 %v355
    %v360 = vunpack.c.l.bf16 %v356
    %v361 = vunpack.c.l.bf16 %v357
    %s362 = sld [smem:[#allocation3 + $0x9]]
    %v363 = vstv %s362
    %v364 = vmul.f32 %v358, %v363
    %v365 = vmul.f32 %v359, %v363
    %v366 = vmul.f32 %v360, %v363
    %v367 = vmul.f32 %v361, %v363
    %v368 = vadd.f32 %v350, %v364
    %v369 = vadd.f32 %v351, %v365
    %v370 = vadd.f32 %v352, %v366
    %v371 = vadd.f32 %v353, %v367
    %v372 = vld [vmem:[#allocation19] sm:$0xf]
    %v373 = vld [vmem:[#allocation19 + $0x4] sm:$0xf]
    %v374 = vld [vmem:[#allocation19 + $0x8] sm:$0xf]
    %v375 = vld [vmem:[#allocation19 + $0xc] sm:$0xf]
    %v376 = vunpack.c.l.bf16 %v372
    %v377 = vunpack.c.l.bf16 %v373
    %v378 = vunpack.c.l.bf16 %v374
    %v379 = vunpack.c.l.bf16 %v375
    %s380 = sld [smem:[#allocation3 + $0xa]]
    %v381 = vstv %s380
    %v382 = vmul.f32 %v376, %v381
    %v383 = vmul.f32 %v377, %v381
    %v384 = vmul.f32 %v378, %v381
    %v385 = vmul.f32 %v379, %v381
    %v386 = vadd.f32 %v368, %v382
    %v387 = vadd.f32 %v369, %v383
    %v388 = vadd.f32 %v370, %v384
    %v389 = vadd.f32 %v371, %v385
    %v390 = vld [vmem:[#allocation21] sm:$0xf]
    %v391 = vld [vmem:[#allocation21 + $0x4] sm:$0xf]
    %v392 = vld [vmem:[#allocation21 + $0x8] sm:$0xf]
    %v393 = vld [vmem:[#allocation21 + $0xc] sm:$0xf]
    %v394 = vunpack.c.l.bf16 %v390
    %v395 = vunpack.c.l.bf16 %v391
    %v396 = vunpack.c.l.bf16 %v392
    %v397 = vunpack.c.l.bf16 %v393
    %s398 = sld [smem:[#allocation3 + $0xb]]
    %v399 = vstv %s398
    %v400 = vmul.f32 %v394, %v399
    %v401 = vmul.f32 %v395, %v399
    %v402 = vmul.f32 %v396, %v399
    %v403 = vmul.f32 %v397, %v399
    %v404 = vadd.f32 %v386, %v400
    %v405 = vadd.f32 %v387, %v401
    %v406 = vadd.f32 %v388, %v402
    %v407 = vadd.f32 %v389, %v403
    %v408 = vpack.c.bf16 %v405, %v404
    %v409 = vpack.c.bf16 %v407, %v406
    %v412 = vunpack.c.l.b16 %v408
    %v413 = vunpack.c.h.b16 %v408
    %v414 = vunpack.c.l.b16 %v409
    %v415 = vunpack.c.h.b16 %v409
    %v416 = vpack.c.b16 %v412, %v412
    %v417 = vpack.c.b16 %v413, %v413
    %v418 = vpack.c.b16 %v414, %v414
    %v419 = vpack.c.b16 %v415, %v415
    %424 = vst [vmem:[#allocation22] sm:$0xf] %v416
    %425 = vst [vmem:[#allocation22 + $0x4] sm:$0xf] %v417
    %426 = vst [vmem:[#allocation22 + $0x8] sm:$0xf] %v418
    %427 = vst [vmem:[#allocation22 + $0xc] sm:$0xf] %v419
    // Predicated region
    $region94: #{tpu_custom_call.1} parent=1 // pred_check
      _
    $region95: #{tpu_custom_call.1} parent=1 // pred_check_branch
      %429 = sbr.rel (0) target = $region97
    $region96: #{tpu_custom_call.1} parent=1 // pred_region
      %s431 = ssub.s32 256, 256
      %432 = vsyncadd [#allocation6], %s431
      %s433 = sshll.u32 [#allocation22], 4
      %s434 = int_to_ptr.vmem [resolvable:$true] %s433
      %439 = dma.vmem_to_hbm [thread:$0]  %s434, 256, %s13, [#allocation6], 64, 64, 4
    $region97: #{tpu_custom_call.1} parent=1 // pred_fallthru
      _
    // Predicated region
    $region98: #{tpu_custom_call.1} parent=1 // pred_check
      _
    $region99: #{tpu_custom_call.1} parent=1 // pred_check_branch
      %441 = sbr.rel (0) target = $region101
    $region100: #{tpu_custom_call.1} parent=1 // pred_region
      %442 = dma.done [#allocation6], 256
    $region101: #{tpu_custom_call.1} parent=1 // pred_fallthru
      _
    %443 = vsyncpa [#allocation5], 1
    %444 = vsyncpa [#allocation8], 1
    %445 = vsyncpa [#allocation11], 1
    %446 = vsyncpa [#allocation14], 1
    %447 = vsyncpa [#allocation17], 1
    %448 = vsyncpa [#allocation20], 1
    %449 = vsyncpa [#allocation6], 1

</llo_original>
